<compile_context>
chip_gen: v5e
topology: v5e:2x2
jax: 0.10.0
libtpu: 0.0.40
codegen_flags: <defaults>
</compile_context>

<pallas_src>
import functools
import math

import numpy as np
import jax
import jax.numpy as jnp
from jax.experimental import pallas as pl
from jax.experimental.pallas import tpu as pltpu


_VMEM_LIMIT_BYTES = 64 * 1024 * 1024  # explicit scoped-VMEM headroom (ok on v5e/v6e/v7x)


def _pick_tq(q_len, k_len):
    """q-tile: multiple of 8 (sublane); capped so (tq, K) intermediates stay small."""
    cap = 128 if k_len >= 2048 else 256
    for cand in (256, 128, 64, 32, 16, 8):
        if cand <= cap and q_len % cand == 0:
            return cand
    return q_len  # fall back to the full (untiled) q axis


def _pick_tk(k_len):
    """K-tile for the flash path."""
    for cand in (512, 256, 128, 64, 32, 16, 8):
        if k_len % cand == 0:
            return cand
    return k_len


# ----------------------------------------------------------------------------
# Kernel A: full-K (needed when attention weights are returned)
# ----------------------------------------------------------------------------
def _attn_full_kernel(valid_smem, *refs, scale, mask_mode):
    if mask_mode == "vector":
        valid_ref, q_ref, k_ref, v_ref, out_ref, attw_ref = refs
    else:
        q_ref, k_ref, v_ref, out_ref, attw_ref = refs

    q = q_ref[0]                                  # (tq, D) native dtype
    q = q * jnp.asarray(scale, q.dtype)           # fold 1/sqrt(d) into q (tq*D work)
    k = k_ref[0]                                  # (K,  D)
    v = v_ref[0]                                  # (K,  Dv)

    # scores = (q*scale) @ k^T — contraction on D; native-dtype MXU, f32 acc.
    scores = jax.lax.dot_general(
        q, k, (((1,), (1,)), ((), ())),
        preferred_element_type=jnp.float32)       # (tq, K) f32

    if mask_mode != "none":
        kpos = jax.lax.broadcasted_iota(jnp.int32, scores.shape, 1)
        if mask_mode == "scalar":
            valid = valid_smem[pl.program_id(0)]  # per-batch length from SMEM
        else:
            valid = valid_ref[0]                  # (tq, 1) int32 per-query lengths
        scores = jnp.where(kpos < valid, scores, -1e6)

    m = jnp.max(scores, axis=-1, keepdims=True)
    e = jnp.exp(scores - m)
    s = jnp.sum(e, axis=-1, keepdims=True)
    w = e * pl.reciprocal(s, approx=True)         # EUP reciprocal (free slot)

    attw_ref[0] = w.astype(attw_ref.dtype)        # weights in input dtype (bf16 if bf16 in)
    # TODO(synk): training-mode dropout on `w` (pltpu.prng_seed/prng_random_bits);
    # eval-mode nn.Dropout is identity, which is what is implemented here.
    out_ref[0] = jnp.dot(w.astype(v.dtype), v,
                         preferred_element_type=jnp.float32).astype(out_ref.dtype)


# ----------------------------------------------------------------------------
# Kernel B: flash-style K-tiled online softmax (no weights output)
# ----------------------------------------------------------------------------
def _attn_flash_kernel(valid_smem, *refs, scale, mask_mode, tk):
    if mask_mode == "vector":
        valid_ref, q_ref, k_ref, v_ref, out_ref, m_sc, l_sc, acc_sc = refs
    else:
        q_ref, k_ref, v_ref, out_ref, m_sc, l_sc, acc_sc = refs

    kv = pl.program_id(2)

    @pl.when(kv == 0)
    def _():
        m_sc[...] = jnp.full_like(m_sc, -jnp.inf)
        l_sc[...] = jnp.zeros_like(l_sc)
        acc_sc[...] = jnp.zeros_like(acc_sc)

    q = q_ref[0]
    q = q * jnp.asarray(scale, q.dtype)
    k = k_ref[0]                                  # (tk, D)
    v = v_ref[0]                                  # (tk, Dv)

    s = jax.lax.dot_general(q, k, (((1,), (1,)), ((), ())),
                            preferred_element_type=jnp.float32)   # (tq, tk)

    if mask_mode != "none":
        kpos = jax.lax.broadcasted_iota(jnp.int32, s.shape, 1) + kv * tk
        if mask_mode == "scalar":
            valid = valid_smem[pl.program_id(0)]
        else:
            valid = valid_ref[0]
        s = jnp.where(kpos < valid, s, -1e6)

    m_prev = m_sc[...]
    m_new = jnp.maximum(m_prev, jnp.max(s, axis=-1, keepdims=True))
    alpha = jnp.exp(m_prev - m_new)
    p = jnp.exp(s - m_new)
    l_sc[...] = alpha * l_sc[...] + jnp.sum(p, axis=-1, keepdims=True)
    acc_sc[...] = alpha * acc_sc[...] + jnp.dot(
        p.astype(v.dtype), v, preferred_element_type=jnp.float32)
    m_sc[...] = m_new

    @pl.when(kv == pl.num_programs(2) - 1)
    def _():
        out_ref[0] = (acc_sc[...] *
                      pl.reciprocal(l_sc[...], approx=True)).astype(out_ref.dtype)


# ----------------------------------------------------------------------------
# Wrapper
# ----------------------------------------------------------------------------
def dot_product_attention(queries, keys, values, valid_lens=None,
                          return_weights=True):
    """queries: (B, Q, D), keys: (B, K, D), values: (B, K, Dv) — any float dtype
    (bf16 recommended; matmuls accumulate in f32).  valid_lens: None, (B,) or (B, Q).
    Returns (output (B,Q,Dv), weights (B,Q,K) or None)."""
    B, Q, D = queries.shape
    K = keys.shape[1]
    Dv = values.shape[-1]
    out_dtype = queries.dtype
    scale = 1.0 / math.sqrt(D)

    # Normalize valid_lens like d2l.masked_softmax; specialize the kernel per mode.
    if valid_lens is None:
        mask_mode = "none"                         # no iota/compare/select at all
        valid_smem = jnp.zeros((1,), jnp.int32)    # dummy scalar-prefetch operand
        valid_vmem = None
    elif valid_lens.ndim == 1:
        mask_mode = "scalar"                       # per-batch length, lives in SMEM
        valid_smem = valid_lens.astype(jnp.int32)
        valid_vmem = None
    else:
        mask_mode = "vector"                       # per-(batch, query) lengths
        valid_smem = jnp.zeros((1,), jnp.int32)
        valid_vmem = valid_lens.astype(jnp.int32).reshape(B, Q, 1)

    tq = _pick_tq(Q, K)
    # TODO(synk): for best store bandwidth, callers should use Dv / K that are
    # multiples of 128 (lane-dense output stores); no wrapper-side padding here.

    if return_weights:
        grid = (B, Q // tq)
        kernel = functools.partial(_attn_full_kernel, scale=scale,
                                   mask_mode=mask_mode)
        in_specs, operands = [], []
        if mask_mode == "vector":
            in_specs.append(pl.BlockSpec((1, tq, 1), lambda b, qi, vl: (b, qi, 0)))
            operands.append(valid_vmem)
        in_specs += [
            pl.BlockSpec((1, tq, D), lambda b, qi, vl: (b, qi, 0)),   # Q tile
            pl.BlockSpec((1, K, D), lambda b, qi, vl: (b, 0, 0)),     # K (resident across qi)
            pl.BlockSpec((1, K, Dv), lambda b, qi, vl: (b, 0, 0)),    # V (resident across qi)
        ]
        operands += [queries, keys, values]
        out, attw = pl.pallas_call(
            kernel,
            out_shape=(jax.ShapeDtypeStruct((B, Q, Dv), out_dtype),
                       jax.ShapeDtypeStruct((B, Q, K), out_dtype)),
            grid_spec=pltpu.PrefetchScalarGridSpec(
                num_scalar_prefetch=1,
                grid=grid,
                in_specs=in_specs,
                out_specs=(pl.BlockSpec((1, tq, Dv), lambda b, qi, vl: (b, qi, 0)),
                           pl.BlockSpec((1, tq, K), lambda b, qi, vl: (b, qi, 0)))),
            compiler_params=pltpu.CompilerParams(
                dimension_semantics=("parallel", "parallel"),
                vmem_limit_bytes=_VMEM_LIMIT_BYTES),
        )(valid_smem, *operands)
        return out, attw

    # Flash path: K tiled, online softmax, no (B,Q,K) HBM writeback.
    tk = _pick_tk(K)
    grid = (B, Q // tq, K // tk)
    kernel = functools.partial(_attn_flash_kernel, scale=scale,
                               mask_mode=mask_mode, tk=tk)
    in_specs, operands = [], []
    if mask_mode == "vector":
        in_specs.append(pl.BlockSpec((1, tq, 1), lambda b, qi, kv, vl: (b, qi, 0)))
        operands.append(valid_vmem)
    in_specs += [
        pl.BlockSpec((1, tq, D), lambda b, qi, kv, vl: (b, qi, 0)),
        pl.BlockSpec((1, tk, D), lambda b, qi, kv, vl: (b, kv, 0)),
        pl.BlockSpec((1, tk, Dv), lambda b, qi, kv, vl: (b, kv, 0)),
    ]
    operands += [queries, keys, values]
    out = pl.pallas_call(
        kernel,
        out_shape=jax.ShapeDtypeStruct((B, Q, Dv), out_dtype),
        grid_spec=pltpu.PrefetchScalarGridSpec(
            num_scalar_prefetch=1,
            grid=grid,
            in_specs=in_specs,
            out_specs=pl.BlockSpec((1, tq, Dv), lambda b, qi, kv, vl: (b, qi, 0)),
            scratch_shapes=[pltpu.VMEM((tq, 1), jnp.float32),
                            pltpu.VMEM((tq, 1), jnp.float32),
                            pltpu.VMEM((tq, Dv), jnp.float32)]),
        compiler_params=pltpu.CompilerParams(
            dimension_semantics=("parallel", "parallel", "arbitrary"),
            vmem_limit_bytes=_VMEM_LIMIT_BYTES),
    )(valid_smem, *operands)
    return out, None


# ----------------------------------------------------------------------------
# Module wrapper (forward semantics of the PyTorch DotProductAttention)
# ----------------------------------------------------------------------------
class DotProductAttention:
    """缩放点积注意力 — Pallas TPU forward (eval-mode dropout == identity)."""

    def __init__(self, dropout=0.0):
        self.dropout = dropout
        self.attention_weights = None

    def __call__(self, queries, keys, values, valid_lens=None):
        out, attw = dot_product_attention(queries, keys, values, valid_lens,
                                          return_weights=True)
        self.attention_weights = attw
        return out


# ----------------------------------------------------------------------------
# Pure-JAX reference (mirrors d2l.masked_softmax / DotProductAttention.forward)
# ----------------------------------------------------------------------------
def _masked_softmax_ref(X, valid_lens):
    if valid_lens is None:
        return jax.nn.softmax(X, axis=-1)
    B, Q, K = X.shape
    if valid_lens.ndim == 1:
        vl = jnp.repeat(valid_lens, Q)
    else:
        vl = valid_lens.reshape(-1)
    Xf = X.reshape(-1, K)
    mask = jnp.arange(K)[None, :] < vl[:, None]
    Xf = jnp.where(mask, Xf, -1e6)
    return jax.nn.softmax(Xf.reshape(B, Q, K), axis=-1)


def _reference(queries, keys, values, valid_lens):
    d = queries.shape[-1]
    scores = jnp.einsum('bqd,bkd->bqk', queries, keys) / math.sqrt(d)
    w = _masked_softmax_ref(scores, valid_lens)
    return jnp.einsum('bqk,bkv->bqv', w, values), w


# ----------------------------------------------------------------------------
if __name__ == "__main__":
    B, Q, K, D, Dv = 2, 8, 128, 32, 32

    root = jax.random.PRNGKey(0)
    kq, kk, kv_, kq2, kk2, kv2 = jax.random.split(root, 6)
    queries = jax.random.normal(kq, (B, Q, D), jnp.float32)
    keys = jax.random.normal(kk, (B, K, D), jnp.float32)
    values = jax.random.normal(kv_, (B, K, Dv), jnp.float32)
    valid_1d = jnp.array([50, 100], dtype=jnp.int32)
    valid_2d = jnp.tile(jnp.arange(1, Q + 1, dtype=jnp.int32) * (K // Q), (B, 1))

    attn = DotProductAttention(dropout=0.0)

    # 1) f32, per-batch (1-D) valid_lens -> SMEM-scalar mask path, weights returned.
    out = attn(queries, keys, values, valid_1d)
    jax.block_until_ready((out, attn.attention_weights))
    ref_out, ref_w = _reference(queries, keys, values, valid_1d)
    np.testing.assert_allclose(np.asarray(out), np.asarray(ref_out),
                               rtol=5e-3, atol=5e-3)
    np.testing.assert_allclose(np.asarray(attn.attention_weights),
                               np.asarray(ref_w), rtol=5e-3, atol=5e-3)
    assert out.shape == (B, Q, Dv)
    assert attn.attention_weights.shape == (B, Q, K)

    # 2) f32, per-query (2-D) valid_lens -> VMEM vector-mask path.
    out = attn(queries, keys, values, valid_2d)
    jax.block_until_ready((out, attn.attention_weights))
    ref_out, ref_w = _reference(queries, keys, values, valid_2d)
    np.testing.assert_allclose(np.asarray(out), np.asarray(ref_out),
                               rtol=5e-3, atol=5e-3)
    np.testing.assert_allclose(np.asarray(attn.attention_weights),
                               np.asarray(ref_w), rtol=5e-3, atol=5e-3)

    # 3) f32, no masking -> specialized unmasked kernel (no iota/compare/select).
    out = attn(queries, keys, values, None)
    jax.block_until_ready((out, attn.attention_weights))
    ref_out, ref_w = _reference(queries, keys, values, None)
    np.testing.assert_allclose(np.asarray(out), np.asarray(ref_out),
                               rtol=5e-3, atol=5e-3)
    np.testing.assert_allclose(np.asarray(attn.attention_weights),
                               np.asarray(ref_w), rtol=5e-3, atol=5e-3)

    # 4) f32, flash (K-tiled online-softmax) path: output only, K split in 2 tiles.
    B2, Q2, K2 = 2, 8, 256
    q2 = jax.random.normal(kq2, (B2, Q2, D), jnp.float32)
    k2 = jax.random.normal(kk2, (B2, K2, D), jnp.float32)
    v2 = jax.random.normal(kv2, (B2, K2, Dv), jnp.float32)
    valid2 = jnp.array([70, 200], dtype=jnp.int32)
    out4, w4 = dot_product_attention(q2, k2, v2, valid2, return_weights=False)
    jax.block_until_ready(out4)
    assert w4 is None
    ref_out4, _ = _reference(q2, k2, v2, valid2)
    np.testing.assert_allclose(np.asarray(out4), np.asarray(ref_out4),
                               rtol=5e-3, atol=5e-3)

    # 5) bf16 inputs (native-dtype MXU path, f32 accumulation) via the flash kernel.
    out5, _ = dot_product_attention(q2.astype(jnp.bfloat16),
                                    k2.astype(jnp.bfloat16),
                                    v2.astype(jnp.bfloat16),
                                    valid2, return_weights=False)
    jax.block_until_ready(out5)
    assert out5.dtype == jnp.bfloat16
    np.testing.assert_allclose(np.asarray(out5, dtype=np.float32),
                               np.asarray(ref_out4), rtol=5e-2, atol=5e-2)

    print("KERNEL_OK")
</pallas_src>

<mosaic_0001>
module attributes {stable_mosaic.version = 11 : i64} {
  func.func @_attn_full_kernel(%arg0: i32, %arg1: i32, %arg2: memref<2xi32, #tpu.memory_space<smem>>, %arg3: memref<1x8x32xf32, #tpu.memory_space<vmem>>, %arg4: memref<1x128x32xf32, #tpu.memory_space<vmem>>, %arg5: memref<1x128x32xf32, #tpu.memory_space<vmem>>, %arg6: memref<1x8x32xf32, #tpu.memory_space<vmem>>, %arg7: memref<1x8x128xf32, #tpu.memory_space<vmem>>) attributes {dimension_semantics = [#tpu.dimension_semantics<parallel>, #tpu.dimension_semantics<parallel>], iteration_bounds = array<i64: 2, 1>, scalar_prefetch = 1 : i64, scratch_operands = 0 : i64, tpu.core_type = #tpu.core_type<tc>, window_params = [{transform_indices = @transform_0, window_bounds = array<i64: 1, 8, 32>}, {transform_indices = @transform_1, window_bounds = array<i64: 1, 128, 32>}, {transform_indices = @transform_2, window_bounds = array<i64: 1, 128, 32>}, {transform_indices = @transform_3, window_bounds = array<i64: 1, 8, 32>}, {transform_indices = @transform_4, window_bounds = array<i64: 1, 8, 128>}]} {
    %c0 = arith.constant 0 : index
    %c0_0 = arith.constant 0 : index
    %c0_1 = arith.constant 0 : index
    %0 = vector.load %arg3[%c0, %c0_0, %c0_1] : memref<1x8x32xf32, #tpu.memory_space<vmem>>, vector<1x8x32xf32>
    %1 = vector.shape_cast %0 : vector<1x8x32xf32> to vector<8x32xf32>
    %cst = arith.constant 0.176776692 : f32
    %2 = vector.broadcast %cst : f32 to vector<8x32xf32>
    %3 = arith.mulf %1, %2 : vector<8x32xf32>
    %c0_2 = arith.constant 0 : index
    %c0_3 = arith.constant 0 : index
    %c0_4 = arith.constant 0 : index
    %4 = vector.load %arg4[%c0_2, %c0_3, %c0_4] : memref<1x128x32xf32, #tpu.memory_space<vmem>>, vector<1x128x32xf32>
    %5 = vector.shape_cast %4 : vector<1x128x32xf32> to vector<128x32xf32>
    %c0_5 = arith.constant 0 : index
    %c0_6 = arith.constant 0 : index
    %c0_7 = arith.constant 0 : index
    %6 = vector.load %arg5[%c0_5, %c0_6, %c0_7] : memref<1x128x32xf32, #tpu.memory_space<vmem>>, vector<1x128x32xf32>
    %7 = vector.shape_cast %6 : vector<1x128x32xf32> to vector<128x32xf32>
    %cst_8 = arith.constant dense<0.000000e+00> : vector<8x128xf32>
    %8 = tpu.matmul %3, %5, %cst_8 {dimension_numbers = #tpu.dot_dimension_numbers<[1], [1], [0], [0], [0, 0, 1, 0], [], []>} : vector<8x32xf32>, vector<128x32xf32>, vector<8x128xf32> -> vector<8x128xf32>
    %9 = tpu.iota {dimensions = array<i32: 1>} : vector<8x128xi32>
    %10 = arith.index_cast %arg0 : i32 to index
    %11 = memref.load %arg2[%10] : memref<2xi32, #tpu.memory_space<smem>>
    %12 = vector.broadcast %11 : i32 to vector<8x128xi32>
    %13 = arith.cmpi slt, %9, %12 : vector<8x128xi32>
    %cst_9 = arith.constant -1.000000e+06 : f32
    %14 = vector.broadcast %cst_9 : f32 to vector<8x128xf32>
    %15 = arith.select %13, %8, %14 : vector<8x128xi1>, vector<8x128xf32>
    %cst_10 = arith.constant dense<0xFF800000> : vector<8xf32>
    %16 = vector.multi_reduction <maximumf>, %15, %cst_10 [1] : vector<8x128xf32> to vector<8xf32>
    %17 = vector.shape_cast %16 : vector<8xf32> to vector<8x1xf32>
    %18 = vector.broadcast %17 : vector<8x1xf32> to vector<8x128xf32>
    %19 = arith.subf %15, %18 : vector<8x128xf32>
    %20 = math.exp %19 : vector<8x128xf32>
    %cst_11 = arith.constant dense<0.000000e+00> : vector<8xf32>
    %21 = vector.multi_reduction <add>, %20, %cst_11 [1] : vector<8x128xf32> to vector<8xf32>
    %22 = vector.shape_cast %21 : vector<8xf32> to vector<8x1xf32>
    %23 = tpu.reciprocal %22 {approx = true} : vector<8x1xf32> -> vector<8x1xf32>
    %24 = vector.broadcast %23 : vector<8x1xf32> to vector<8x128xf32>
    %25 = arith.mulf %20, %24 : vector<8x128xf32>
    %c0_12 = arith.constant 0 : index
    %c0_13 = arith.constant 0 : index
    %c0_14 = arith.constant 0 : index
    %26 = vector.load %arg7[%c0_12, %c0_13, %c0_14] : memref<1x8x128xf32, #tpu.memory_space<vmem>>, vector<1x8x128xf32>
    %27 = vector.shape_cast %26 : vector<1x8x128xf32> to vector<8x128xf32>
    %28 = vector.shape_cast %25 : vector<8x128xf32> to vector<1x8x128xf32>
    tpu.vector_store %arg7[%c0_12, %c0_13, %c0_14], %28 {strides = array<i32>} : memref<1x8x128xf32, #tpu.memory_space<vmem>>, vector<1x8x128xf32>,
    %cst_15 = arith.constant dense<0.000000e+00> : vector<8x32xf32>
    %29 = tpu.matmul %25, %7, %cst_15 {dimension_numbers = #tpu.dot_dimension_numbers<[1], [0], [0], [1], [0, 0, 1, 1], [], []>} : vector<8x128xf32>, vector<128x32xf32>, vector<8x32xf32> -> vector<8x32xf32>
    %c0_16 = arith.constant 0 : index
    %c0_17 = arith.constant 0 : index
    %c0_18 = arith.constant 0 : index
    %30 = vector.load %arg6[%c0_16, %c0_17, %c0_18] : memref<1x8x32xf32, #tpu.memory_space<vmem>>, vector<1x8x32xf32>
    %31 = vector.shape_cast %30 : vector<1x8x32xf32> to vector<8x32xf32>
    %32 = vector.shape_cast %29 : vector<8x32xf32> to vector<1x8x32xf32>
    tpu.vector_store %arg6[%c0_16, %c0_17, %c0_18], %32 {strides = array<i32>} : memref<1x8x32xf32, #tpu.memory_space<vmem>>, vector<1x8x32xf32>,
    return
  }
  func.func @transform_0(%arg0: i32, %arg1: i32, %arg2: memref<2xi32, #tpu.memory_space<smem>>) -> (i32, i32, i32) {
    %c0_i32 = arith.constant 0 : i32
    %c0_i32_0 = arith.constant 0 : i32
    return %arg0, %arg1, %c0_i32 : i32, i32, i32
  }
  func.func @transform_1(%arg0: i32, %arg1: i32, %arg2: memref<2xi32, #tpu.memory_space<smem>>) -> (i32, i32, i32) {
    %c0_i32 = arith.constant 0 : i32
    %c0_i32_0 = arith.constant 0 : i32
    %c0_i32_1 = arith.constant 0 : i32
    return %arg0, %c0_i32, %c0_i32_0 : i32, i32, i32
  }
  func.func @transform_2(%arg0: i32, %arg1: i32, %arg2: memref<2xi32, #tpu.memory_space<smem>>) -> (i32, i32, i32) {
    %c0_i32 = arith.constant 0 : i32
    %c0_i32_0 = arith.constant 0 : i32
    %c0_i32_1 = arith.constant 0 : i32
    return %arg0, %c0_i32, %c0_i32_0 : i32, i32, i32
  }
  func.func @transform_3(%arg0: i32, %arg1: i32, %arg2: memref<2xi32, #tpu.memory_space<smem>>) -> (i32, i32, i32) {
    %c0_i32 = arith.constant 0 : i32
    %c0_i32_0 = arith.constant 0 : i32
    return %arg0, %arg1, %c0_i32 : i32, i32, i32
  }
  func.func @transform_4(%arg0: i32, %arg1: i32, %arg2: memref<2xi32, #tpu.memory_space<smem>>) -> (i32, i32, i32) {
    %c0_i32 = arith.constant 0 : i32
    %c0_i32_0 = arith.constant 0 : i32
    return %arg0, %arg1, %c0_i32 : i32, i32, i32
  }
}

</mosaic_0001>

<llo_original>
// kernel: tpu_custom_call.1
$region0: #{tpu_custom_call.1}
  #allocation0 [shape = 'u32[]', space=smem, size = 0x4, offset = 0x4, fixed_abs, tag = 'smem constant byte address 0x4 - core index']
  #allocation1 [shape = 'u32[72,128]{1,0:T(1,128)}', space=vmem, size = 0x9000, scoped, tag = 'internal scratch']
  #allocation2 [shape = 's32[1]{0}', space=sflag, size = 0x4, scoped, tag = 'scoped memory for tpu_custom_call.1']
  #allocation3 [shape = 'u8[512]{0}', space=smem, size = 0x200, scoped, tag = 'prefetched SMEM operand 0']
  %s0 = inlined_call_operand.vmem [shape: s32[2], index: 0, kind: input, shape index: {}]
  %s1 = inlined_call_operand.vmem [shape: f32[2,8,32], index: 1, kind: input, shape index: {}]
  %s2 = inlined_call_operand.vmem [shape: f32[2,128,32], index: 2, kind: input, shape index: {}]
  %s3 = inlined_call_operand.vmem [shape: f32[2,128,32], index: 3, kind: input, shape index: {}]
  %s4 = inlined_call_operand.hbm [shape: f32[2,8,32], index: 4, kind: output, shape index: {0}]
  %s5 = inlined_call_operand.hbm [shape: f32[2,8,128], index: 5, kind: output, shape index: {1}]
  %6 = xla_tuple %s4, %s5
  %s7 = sld [smem:[#allocation0]]
  $region53: #{tpu_custom_call.1} parent=0
    _
  %s9 = ssub.s32 1, %s7
  %s10 = scalar_select 0, %s9, %s7
  %s12 = sshll.u32 %s0, 4
  %s13 = int_to_ptr.vmem [resolvable:$true] %s12
  %15 = dma.vmem_to_smem %s13, 16, [#allocation3], [#allocation2]
  %17 = dma.done [#allocation2], 16
  %18 = sfence
  $region1: #{tpu_custom_call.1} parent=0
    #allocation4 [shape = 'u8[8192]{0}', space=vmem, size = 0x2000, scoped, tag = 'output window, operand 0']
    #allocation5 [shape = 's32[2]{0}', space=sflag, size = 0x8, scoped, tag = 'scoped memory for tpu_custom_call.1']
    #allocation6 [shape = 'u8[8192]{0}', space=vmem, size = 0x2000, scoped, tag = 'output window, operand 1']
    #allocation7 [shape = 's32[2]{0}', space=sflag, size = 0x8, scoped, tag = 'scoped memory for tpu_custom_call.1']
    %19 = vsyncpa [#allocation5], 0
    %s20 = scalar_lea.sflag [#allocation5], 1
    %21 = vsyncpa %s20, 0
    %22 = vsyncpa [#allocation7], 0
    %s23 = scalar_lea.sflag [#allocation7], 1
    %24 = vsyncpa %s23, 0
    loop: start=0, step=1, limit=4
    $region2: #{tpu_custom_call.1} parent=1 // loop_pre_header
      _
    $region3: #{tpu_custom_call.1} parent=1 // loop_header
      %s26 = sphi 0, %s30
      %p27 = scmp.ge.s32.totalorder %s26, 4
      %s33 = sphi 0, %s45
      %s34 = sphi 0, %s41
      %s35 = sphi 0, %s33
      %s36 = sphi 0, %s34
      %s37 = sphi 0, %s35
      %s38 = sphi 0, %s36
      %s50 = sphi 0, %s52
      %s53 = sphi 0, %s50
      %s54 = sphi 0, %s53
      %s70 = sphi 0, %s54
      %s76 = sphi 0, %s78
      %s79 = sphi 0, %s76
      %s80 = sphi 0, %s79
      %s96 = sphi 0, %s80
      %s102 = sphi 0, %s104
      %s105 = sphi 0, %s102
      %s106 = sphi 0, %s105
      %s122 = sphi 0, %s106
      %s130 = sphi 0, %s132
      %s133 = sphi 0, %s130
      %s134 = sphi 0, %s133
      %s150 = sphi 0, %s134
      %s158 = sphi 0, %s160
      %s161 = sphi 0, %s158
      %s162 = sphi 0, %s161
      %s178 = sphi 0, %s162
    $region4: #{tpu_custom_call.1} parent=1 // loop_header_branch
      %29 = sbr.rel (%p27) target = $region8
    $region5: #{tpu_custom_call.1} parent=1 // loop_body
      %s31 = ssub.s32 %s26, 1
      %s32 = ssub.s32 %s26, 2
      %s39 = sadd.s32 1, %s34
      %p40 = scmp.ge.s32.totalorder %s39, 1
      %s41 = scalar_select %p40, 0, %s39
      %s42 = sadd.s32 1, %s33
      %s43 = scalar_select %p40, %s42, %s33
      %p44 = scmp.ge.s32.totalorder %s43, 2
      %s45 = scalar_select %p44, 0, %s43
      %s46 = ssub.s32 %s33, %s45
      %s47 = ssub.s32 %s34, %s41
      %s48 = sor.u32 %s46, %s47
      %p49 = scmp.eq.s32.totalorder %s48, 0
      %s51 = sadd.s32 %s50, 1
      %s52 = scalar_select %p49, %s50, %s51
      %p55 = pneg %p49
      %p56 = scmp.eq.s32.totalorder %s26, 1
      %p57 = por %p55, %p56
      %p58 = scmp.ne.s32.totalorder %s50, %s53
      %p59 = scmp.eq.s32.totalorder %s26, 0
      %p60 = por %p58, %p59
      %p61 = scmp.ne.s32.totalorder %s50, %s53
      %p62 = scmp.eq.s32.totalorder %s31, 1
      %p63 = por %p61, %p62
      %p64 = scmp.ne.s32.totalorder %s53, %s54
      %p65 = scmp.eq.s32.totalorder %s31, 0
      %p66 = por %p64, %p65
      %p67 = scmp.ne.s32.totalorder %s53, %s54
      %p68 = scmp.eq.s32.totalorder %s32, 1
      %p69 = por %p67, %p68
      %p71 = scmp.ne.s32.totalorder %s54, %s70
      %p72 = scmp.eq.s32.totalorder %s32, 0
      %p73 = por %p71, %p72
      %s74 = ssub.s32 %s33, %s45
      %p75 = scmp.eq.s32.totalorder %s74, 0
      %s77 = sadd.s32 %s76, 1
      %s78 = scalar_select %p75, %s76, %s77
      %p81 = pneg %p75
      %p82 = scmp.eq.s32.totalorder %s26, 1
      %p83 = por %p81, %p82
      %p84 = scmp.ne.s32.totalorder %s76, %s79
      %p85 = scmp.eq.s32.totalorder %s26, 0
      %p86 = por %p84, %p85
      %p87 = scmp.ne.s32.totalorder %s76, %s79
      %p88 = scmp.eq.s32.totalorder %s31, 1
      %p89 = por %p87, %p88
      %p90 = scmp.ne.s32.totalorder %s79, %s80
      %p91 = scmp.eq.s32.totalorder %s31, 0
      %p92 = por %p90, %p91
      %p93 = scmp.ne.s32.totalorder %s79, %s80
      %p94 = scmp.eq.s32.totalorder %s32, 1
      %p95 = por %p93, %p94
      %p97 = scmp.ne.s32.totalorder %s80, %s96
      %p98 = scmp.eq.s32.totalorder %s32, 0
      %p99 = por %p97, %p98
      %s100 = ssub.s32 %s33, %s45
      %p101 = scmp.eq.s32.totalorder %s100, 0
      %s103 = sadd.s32 %s102, 1
      %s104 = scalar_select %p101, %s102, %s103
      %p107 = pneg %p101
      %p108 = scmp.eq.s32.totalorder %s26, 1
      %p109 = por %p107, %p108
      %p110 = scmp.ne.s32.totalorder %s102, %s105
      %p111 = scmp.eq.s32.totalorder %s26, 0
      %p112 = por %p110, %p111
      %p113 = scmp.ne.s32.totalorder %s102, %s105
      %p114 = scmp.eq.s32.totalorder %s31, 1
      %p115 = por %p113, %p114
      %p116 = scmp.ne.s32.totalorder %s105, %s106
      %p117 = scmp.eq.s32.totalorder %s31, 0
      %p118 = por %p116, %p117
      %p119 = scmp.ne.s32.totalorder %s105, %s106
      %p120 = scmp.eq.s32.totalorder %s32, 1
      %p121 = por %p119, %p120
      %p123 = scmp.ne.s32.totalorder %s106, %s122
      %p124 = scmp.eq.s32.totalorder %s32, 0
      %p125 = por %p123, %p124
      %s126 = ssub.s32 %s33, %s45
      %s127 = ssub.s32 %s34, %s41
      %s128 = sor.u32 %s126, %s127
      %p129 = scmp.eq.s32.totalorder %s128, 0
      %s131 = sadd.s32 %s130, 1
      %s132 = scalar_select %p129, %s130, %s131
      %p135 = pneg %p129
      %p136 = scmp.eq.s32.totalorder %s26, 1
      %p137 = por %p135, %p136
      %p138 = scmp.ne.s32.totalorder %s130, %s133
      %p139 = scmp.eq.s32.totalorder %s26, 0
      %p140 = por %p138, %p139
      %p141 = scmp.ne.s32.totalorder %s130, %s133
      %p142 = scmp.eq.s32.totalorder %s31, 1
      %p143 = por %p141, %p142
      %p144 = scmp.ne.s32.totalorder %s133, %s134
      %p145 = scmp.eq.s32.totalorder %s31, 0
      %p146 = por %p144, %p145
      %p147 = scmp.ne.s32.totalorder %s133, %s134
      %p148 = scmp.eq.s32.totalorder %s32, 1
      %p149 = por %p147, %p148
      %p151 = scmp.ne.s32.totalorder %s134, %s150
      %p152 = scmp.eq.s32.totalorder %s32, 0
      %p153 = por %p151, %p152
      %s154 = ssub.s32 %s33, %s45
      %s155 = ssub.s32 %s34, %s41
      %s156 = sor.u32 %s154, %s155
      %p157 = scmp.eq.s32.totalorder %s156, 0
      %s159 = sadd.s32 %s158, 1
      %s160 = scalar_select %p157, %s158, %s159
      %p163 = pneg %p157
      %p164 = scmp.eq.s32.totalorder %s26, 1
      %p165 = por %p163, %p164
      %p166 = scmp.ne.s32.totalorder %s158, %s161
      %p167 = scmp.eq.s32.totalorder %s26, 0
      %p168 = por %p166, %p167
      %p169 = scmp.ne.s32.totalorder %s158, %s161
      %p170 = scmp.eq.s32.totalorder %s31, 1
      %p171 = por %p169, %p170
      %p172 = scmp.ne.s32.totalorder %s161, %s162
      %p173 = scmp.eq.s32.totalorder %s31, 0
      %p174 = por %p172, %p173
      %p175 = scmp.ne.s32.totalorder %s161, %s162
      %p176 = scmp.eq.s32.totalorder %s32, 1
      %p177 = por %p175, %p176
      %p179 = scmp.ne.s32.totalorder %s162, %s178
      %p180 = scmp.eq.s32.totalorder %s32, 0
      %p181 = por %p179, %p180
      %p182 = scmp.le.s32.totalorder 1, %s26
      %p183 = scmp.lt.s32.totalorder %s26, 3
      %p184 = pnand %p182, %p183
      %p185 = pneg %p184
      // Predicated region
      $region9: #{tpu_custom_call.1} parent=5 // pred_check
        _
      $region10: #{tpu_custom_call.1} parent=5 // pred_check_branch
        %187 = sbr.rel (%p184) target = $region12
      $region11: #{tpu_custom_call.1} parent=5 // pred_region
        %s188 = ssub.s32 %s26, 1
      $region12: #{tpu_custom_call.1} parent=5 // pred_fallthru
        _
      %p189 = scmp.lt.s32.totalorder %s26, 2
      // Predicated region
      $region13: #{tpu_custom_call.1} parent=5 // pred_check
        %p190 = pneg %p189
      $region14: #{tpu_custom_call.1} parent=5 // pred_check_branch
        %192 = sbr.rel (%p190) target = $region16
      $region15: #{tpu_custom_call.1} parent=5 // pred_region
        // Predicated region
        $region17: #{tpu_custom_call.1} parent=15 // pred_check
          %p193 = pneg %p60
        $region18: #{tpu_custom_call.1} parent=15 // pred_check_branch
          %195 = sbr.rel (%p193) target = $region20
        $region19: #{tpu_custom_call.1} parent=15 // pred_region
          %p196 = scmp.lt.s32.totalorder %s33, 1
          %s197 = scalar_select %p196, %s33, 1
          %p198 = scmp.lt.s32.totalorder %s34, 0
          %s199 = scalar_select %p198, %s34, 0
          %s200 = sadd.s32 %s199, %s197
          %s201 = smul.addr %s200, 8
          %s202 = scalar_lea.vmem %s1, %s201
        $region20: #{tpu_custom_call.1} parent=15 // pred_fallthru
          _
        // Predicated region
        $region21: #{tpu_custom_call.1} parent=15 // pred_check
          %p203 = pneg %p86
        $region22: #{tpu_custom_call.1} parent=15 // pred_check_branch
          %205 = sbr.rel (%p203) target = $region24
        $region23: #{tpu_custom_call.1} parent=15 // pred_region
          %p206 = scmp.lt.s32.totalorder %s33, 1
          %s207 = scalar_select %p206, %s33, 1
          %s208 = smul.addr %s207, 16
          %s209 = smul.addr %s208, 8
          %s210 = scalar_lea.vmem %s2, %s209
        $region24: #{tpu_custom_call.1} parent=15 // pred_fallthru
          _
        // Predicated region
        $region25: #{tpu_custom_call.1} parent=15 // pred_check
          %p211 = pneg %p112
        $region26: #{tpu_custom_call.1} parent=15 // pred_check_branch
          %213 = sbr.rel (%p211) target = $region28
        $region27: #{tpu_custom_call.1} parent=15 // pred_region
          %p214 = scmp.lt.s32.totalorder %s33, 1
          %s215 = scalar_select %p214, %s33, 1
          %s216 = smul.addr %s215, 16
          %s217 = smul.addr %s216, 8
          %s218 = scalar_lea.vmem %s3, %s217
        $region28: #{tpu_custom_call.1} parent=15 // pred_fallthru
          _
      $region16: #{tpu_custom_call.1} parent=5 // pred_fallthru
        _
      %p219 = scmp.le.s32.totalorder 1, %s26
      %p220 = scmp.lt.s32.totalorder %s26, 3
      %p221 = pnand %p219, %p220
      %p222 = pneg %p221
      // Predicated region
      $region29: #{tpu_custom_call.1} parent=5 // pred_check
        _
      $region30: #{tpu_custom_call.1} parent=5 // pred_check_branch
        %224 = sbr.rel (%p221) target = $region32
      $region31: #{tpu_custom_call.1} parent=5 // pred_region
        %s225 = ssub.s32 %s26, 1
        %p226 = scmp.lt.s32.totalorder %s35, 1
        %s227 = scalar_select %p226, %s35, 1
        %p228 = scmp.lt.s32.totalorder %s36, 0
        %s229 = scalar_select %p228, %s36, 0
        %s230 = sadd.s32 %s229, %s227
        %s231 = smul.addr %s230, 8
        %s232 = scalar_lea.vmem %s1, %s231
        %p233 = pneg %p66
        %p234 = pneg %p63
        %p235 = scmp.lt.s32.totalorder %s35, 1
        %s236 = scalar_select %p235, %s35, 1
        %s237 = smul.addr %s236, 16
        %s238 = smul.addr %s237, 8
        %s239 = scalar_lea.vmem %s2, %s238
        %p240 = pneg %p92
        %p241 = pneg %p89
        %p242 = scmp.lt.s32.totalorder %s35, 1
        %s243 = scalar_select %p242, %s35, 1
        %s244 = smul.addr %s243, 16
        %s245 = smul.addr %s244, 8
        %s246 = scalar_lea.vmem %s3, %s245
        %p247 = pneg %p118
        %p248 = pneg %p115
        %p249 = pneg %p146
        %p250 = pneg %p143
        %s251 = sand.u32 %s133, 1
        %s252 = scalar_lea.sflag [#allocation5], %s251
        %s253 = sand.u32 %s133, 1
        %s254 = smul.addr %s253, 8
        %s255 = scalar_lea.vmem [#allocation4], %s254
        %p256 = pneg %p174
        %p257 = pneg %p171
        %s258 = sand.u32 %s161, 1
        %s259 = scalar_lea.sflag [#allocation7], %s258
        %s260 = sand.u32 %s161, 1
        %s261 = smul.addr %s260, 8
        %s262 = scalar_lea.vmem [#allocation6], %s261
        %p263 = scmp.lt.s32.totalorder %s35, 1
        %s264 = scalar_select %p263, %s35, 1
        %p265 = scmp.lt.s32.totalorder %s36, 0
        %s266 = scalar_select %p265, %s36, 0
        %s267 = sadd.s32 %s266, %s264
        %s268 = smul.addr %s267, 8
        %s269 = scalar_lea.vmem %s1, %s268
        %p270 = scmp.lt.s32.totalorder %s35, 1
        %s271 = scalar_select %p270, %s35, 1
        %s272 = smul.addr %s271, 16
        %s273 = smul.addr %s272, 8
        %s274 = scalar_lea.vmem %s2, %s273
        %p275 = scmp.lt.s32.totalorder %s35, 1
        %s276 = scalar_select %p275, %s35, 1
        %s277 = smul.addr %s276, 16
        %s278 = smul.addr %s277, 8
        %s279 = scalar_lea.vmem %s3, %s278
        %v280 = vld [vmem:[%s269] sm:$0xff]
        %v281 = vmul.f32 %v280, 0.17677669
        %v282 = vld [vmem:[%s274] sm:$0xff]
        %v283 = vld [vmem:[%s274 + $0x8] sm:$0xff]
        %v284 = vld [vmem:[%s274 + $0x10] sm:$0xff]
        %v285 = vld [vmem:[%s274 + $0x18] sm:$0xff]
        %v286 = vld [vmem:[%s274 + $0x20] sm:$0xff]
        %v287 = vld [vmem:[%s274 + $0x28] sm:$0xff]
        %v288 = vld [vmem:[%s274 + $0x30] sm:$0xff]
        %v289 = vld [vmem:[%s274 + $0x38] sm:$0xff]
        %v290 = vld [vmem:[%s274 + $0x40] sm:$0xff]
        %v291 = vld [vmem:[%s274 + $0x48] sm:$0xff]
        %v292 = vld [vmem:[%s274 + $0x50] sm:$0xff]
        %v293 = vld [vmem:[%s274 + $0x58] sm:$0xff]
        %v294 = vld [vmem:[%s274 + $0x60] sm:$0xff]
        %v295 = vld [vmem:[%s274 + $0x68] sm:$0xff]
        %v296 = vld [vmem:[%s274 + $0x70] sm:$0xff]
        %v297 = vld [vmem:[%s274 + $0x78] sm:$0xff]
        %v298 = vld [vmem:[%s279] sm:$0xff]
        %v299 = vld [vmem:[%s279 + $0x8] sm:$0xff]
        %v300 = vld [vmem:[%s279 + $0x10] sm:$0xff]
        %v301 = vld [vmem:[%s279 + $0x18] sm:$0xff]
        %v302 = vld [vmem:[%s279 + $0x20] sm:$0xff]
        %v303 = vld [vmem:[%s279 + $0x28] sm:$0xff]
        %v304 = vld [vmem:[%s279 + $0x30] sm:$0xff]
        %v305 = vld [vmem:[%s279 + $0x38] sm:$0xff]
        %v306 = vld [vmem:[%s279 + $0x40] sm:$0xff]
        %v307 = vld [vmem:[%s279 + $0x48] sm:$0xff]
        %v308 = vld [vmem:[%s279 + $0x50] sm:$0xff]
        %v309 = vld [vmem:[%s279 + $0x58] sm:$0xff]
        %v310 = vld [vmem:[%s279 + $0x60] sm:$0xff]
        %v311 = vld [vmem:[%s279 + $0x68] sm:$0xff]
        %v312 = vld [vmem:[%s279 + $0x70] sm:$0xff]
        %v313 = vld [vmem:[%s279 + $0x78] sm:$0xff]
        %vm314 = vcmask 261120
        %v316 = vsel %vm314, %v281, 0
        %v319 = vsel %vm314, %v282, 0
        %v322 = vsel %vm314, %v283, 0
        %v325 = vsel %vm314, %v284, 0
        %v328 = vsel %vm314, %v285, 0
        %v331 = vsel %vm314, %v286, 0
        %v334 = vsel %vm314, %v287, 0
        %v337 = vsel %vm314, %v288, 0
        %v340 = vsel %vm314, %v289, 0
        %v343 = vsel %vm314, %v290, 0
        %v346 = vsel %vm314, %v291, 0
        %v349 = vsel %vm314, %v292, 0
        %v352 = vsel %vm314, %v293, 0
        %v355 = vsel %vm314, %v294, 0
        %v358 = vsel %vm314, %v295, 0
        %v361 = vsel %vm314, %v296, 0
        %v364 = vsel %vm314, %v297, 0
        %366 = vmatpush.xpose.msra.mxu0 %v364
        %367 = vmatpush.xpose.msra.mxu0 %v361
        %368 = vmatpush.xpose.msra.mxu0 %v358
        %369 = vmatpush.xpose.msra.mxu0 %v355
        %370 = vmatpush.xpose.msra.mxu0 %v352
        %371 = vmatpush.xpose.msra.mxu0 %v349
        %372 = vmatpush.xpose.msra.mxu0 %v346
        %373 = vmatpush.xpose.msra.mxu0 %v343
        %374 = vmatpush.xpose.msra.mxu0 %v340
        %375 = vmatpush.xpose.msra.mxu0 %v337
        %376 = vmatpush.xpose.msra.mxu0 %v334
        %377 = vmatpush.xpose.msra.mxu0 %v331
        %378 = vmatpush.xpose.msra.mxu0 %v328
        %379 = vmatpush.xpose.msra.mxu0 %v325
        %380 = vmatpush.xpose.msra.mxu0 %v322
        %381 = vmatpush.xpose.msra.mxu0 %v319
        %382 = vmatmul.f32.gmra.mxu0 %v316
        %v383 = vpop.f32.mrf.mxu0
        %v384 = vadd.f32 0.0, %v383
        %385 = vdwg.mxu0
        %v386 = vlaneseq
        %v387 = vand.u32 %v386, 127
        %s388 = sld [smem:[#allocation3 + %s35]]
        %v389 = vstv %s388
        %vm390 = vcmp.lt.s32.totalorder %v387, %v389
        %v391 = vsel %vm390, %v384, -1000000.0
        %392 = vmax.xlane.f32.xlu0 %v391
        %v393 = vpop.xlane.xlu0 %392
        %v394 = vsub.f32 %v391, %v393
        %v395 = vmul.f32 %v394, 1.442695
        %v396 = vpow.pop %v395
        %397 = vadd.xlane.f32.xlu0 %v396
        %v398 = vpop.xlane.xlu0 %397
        %v399 = vrcp.pop %v398
        %v400 = vmul.f32 %v396, %v399
        %401 = vst [vmem:[%s262] sm:$0xff] %v400
        %402 = vmatpush.msra.mxu0 %v313
        %403 = vmatpush.msra.mxu0 %v312
        %404 = vmatpush.msra.mxu0 %v311
        %405 = vmatpush.msra.mxu0 %v310
        %406 = vmatpush.msra.mxu0 %v309
        %407 = vmatpush.msra.mxu0 %v308
        %408 = vmatpush.msra.mxu0 %v307
        %409 = vmatpush.msra.mxu0 %v306
        %410 = vmatpush.msra.mxu0 %v305
        %411 = vmatpush.msra.mxu0 %v304
        %412 = vmatpush.msra.mxu0 %v303
        %413 = vmatpush.msra.mxu0 %v302
        %414 = vmatpush.msra.mxu0 %v301
        %415 = vmatpush.msra.mxu0 %v300
        %416 = vmatpush.msra.mxu0 %v299
        %417 = vmatpush.msra.mxu0 %v298
        %418 = vmatmul.f32.gmra.mxu0 %v400
        %v419 = vpop.f32.mrf.mxu0
        %v420 = vadd.f32 0.0, %v419
        %421 = vdwg.mxu0
        %422 = vst.msk [vmem:[%s255] sm:$0xff] %vm314, %v420
        %s423 = sand.u32 %s133, 1
        %s424 = scalar_lea.sflag [#allocation5], %s423
        %s425 = sand.u32 %s133, 1
        %s426 = smul.addr %s425, 8
        %s427 = scalar_lea.vmem [#allocation4], %s426
        %s428 = sand.u32 %s161, 1
        %s429 = scalar_lea.sflag [#allocation7], %s428
        %s430 = sand.u32 %s161, 1
        %s431 = smul.addr %s430, 8
        %s432 = scalar_lea.vmem [#allocation6], %s431
        // Predicated region
        $region33: #{tpu_custom_call.1} parent=31 // pred_check
          %p433 = pneg %p143
        $region34: #{tpu_custom_call.1} parent=31 // pred_check_branch
          %435 = sbr.rel (%p433) target = $region36
        $region35: #{tpu_custom_call.1} parent=31 // pred_region
          %437 = vsyncadd %s424, 0
          %s438 = sadd.s32 %s36, %s35
          %s439 = smul.addr %s438, 8
          %s440 = scalar_lea.hbm %s4, %s439
          %s442 = sshll.u32 %s427, 4
          %s443 = int_to_ptr.vmem [resolvable:$true] %s442
          %s444 = sshll.u32 %s440, 4
          %s445 = int_to_ptr.hbm [resolvable:$true] %s444
          %447 = dma.vmem_to_hbm [thread:$0]  %s443, 128, %s445, %s424
        $region36: #{tpu_custom_call.1} parent=31 // pred_fallthru
          _
        // Predicated region
        $region37: #{tpu_custom_call.1} parent=31 // pred_check
          %p448 = pneg %p171
        $region38: #{tpu_custom_call.1} parent=31 // pred_check_branch
          %450 = sbr.rel (%p448) target = $region40
        $region39: #{tpu_custom_call.1} parent=31 // pred_region
          %452 = vsyncadd %s429, 0
          %s453 = sadd.s32 %s36, %s35
          %s454 = smul.addr %s453, 8
          %s455 = scalar_lea.hbm %s5, %s454
          %s457 = sshll.u32 %s432, 4
          %s458 = int_to_ptr.vmem [resolvable:$true] %s457
          %s459 = sshll.u32 %s455, 4
          %s460 = int_to_ptr.hbm [resolvable:$true] %s459
          %462 = dma.vmem_to_hbm [thread:$0]  %s458, 128, %s460, %s429
        $region40: #{tpu_custom_call.1} parent=31 // pred_fallthru
          _
      $region32: #{tpu_custom_call.1} parent=5 // pred_fallthru
        _
      %p463 = scmp.le.s32.totalorder 2, %s26
      // Predicated region
      $region41: #{tpu_custom_call.1} parent=5 // pred_check
        %p464 = pneg %p463
      $region42: #{tpu_custom_call.1} parent=5 // pred_check_branch
        %466 = sbr.rel (%p464) target = $region44
      $region43: #{tpu_custom_call.1} parent=5 // pred_region
        %s467 = ssub.s32 %s26, 2
        // Predicated region
        $region45: #{tpu_custom_call.1} parent=43 // pred_check
          %p468 = pneg %p149
        $region46: #{tpu_custom_call.1} parent=43 // pred_check_branch
          %470 = sbr.rel (%p468) target = $region48
        $region47: #{tpu_custom_call.1} parent=43 // pred_region
          %s471 = sand.u32 %s134, 1
          %s472 = scalar_lea.sflag [#allocation5], %s471
          %s473 = sand.u32 %s134, 1
          %s474 = smul.addr %s473, 8
          %s475 = scalar_lea.vmem [#allocation4], %s474
          %477 = dma.done %s472, 128
        $region48: #{tpu_custom_call.1} parent=43 // pred_fallthru
          _
        // Predicated region
        $region49: #{tpu_custom_call.1} parent=43 // pred_check
          %p478 = pneg %p177
        $region50: #{tpu_custom_call.1} parent=43 // pred_check_branch
          %480 = sbr.rel (%p478) target = $region52
        $region51: #{tpu_custom_call.1} parent=43 // pred_region
          %s481 = sand.u32 %s162, 1
          %s482 = scalar_lea.sflag [#allocation7], %s481
          %s483 = sand.u32 %s162, 1
          %s484 = smul.addr %s483, 8
          %s485 = scalar_lea.vmem [#allocation6], %s484
          %487 = dma.done %s482, 128
        $region52: #{tpu_custom_call.1} parent=43 // pred_fallthru
          _
      $region44: #{tpu_custom_call.1} parent=5 // pred_fallthru
        _
    $region6: #{tpu_custom_call.1} parent=1 // loop_footer
      %s30 = sadd.s32 1, %s26
    $region7: #{tpu_custom_call.1} parent=1 // loop_footer_branch
      %25 = sbr.rel target = $region3
    $region8: #{tpu_custom_call.1} parent=1 // loop_exit
      _
    %488 = vsyncpa [#allocation5], 1
    %s489 = scalar_lea.sflag [#allocation5], 1
    %490 = vsyncpa %s489, 1
    %491 = vsyncpa [#allocation7], 1
    %s492 = scalar_lea.sflag [#allocation7], 1
    %493 = vsyncpa %s492, 1

</llo_original>
